<compile_context>
chip_gen: v7x
topology: tpu7x:2x2x1
jax: 0.10.0
libtpu: 0.0.40
codegen_flags: <defaults>
</compile_context>

<pallas_src>
from collections import namedtuple

import jax
import jax.numpy as jnp
from jax.experimental import pallas as pl
from jax.experimental.pallas import tpu as pltpu

_LANE = 128
_SUBLANE = 8

_Cfg = namedtuple("_Cfg", ["block_bytes", "vmem_limit", "num_tc"])


def _chip_config():
    """Generation-aware block sizing / VMEM limits / TensorCore count."""
    kind = ""
    try:
        kind = jax.devices()[0].device_kind.lower()
    except Exception:
        pass
    if "v7" in kind:
        # 2 TCs/chip, 64 MiB VMEM per TC: 6 MiB blocks -> ~24 MiB working set.
        return _Cfg(block_bytes=6 * 1024 * 1024, vmem_limit=32 << 20, num_tc=2)
    if "v6" in kind:
        return _Cfg(block_bytes=4 * 1024 * 1024, vmem_limit=32 << 20, num_tc=1)
    if "v5e" in kind or "v5 lite" in kind or "v5lite" in kind:
        # Stay under the 16 MiB default scoped VMEM (4 x 2 MiB buffers = 8 MiB).
        return _Cfg(block_bytes=2 * 1024 * 1024, vmem_limit=None, num_tc=1)
    # Unknown / other generations: conservative defaults.
    return _Cfg(block_bytes=2 * 1024 * 1024, vmem_limit=None, num_tc=1)


def _swish_kernel(x_ref, o_ref):
    # Clamp compute to f32 (never f64); exp + reciprocal go to the EUP, which
    # is free relative to the DMA-bound roofline of this elementwise kernel.
    xf = x_ref[...].astype(jnp.float32)
    o_ref[...] = (xf * jax.nn.sigmoid(xf)).astype(o_ref.dtype)


def _swish_2d(x2, cfg):
    """Run the Pallas kernel on a 2-D [rows, cols] array (cols % 128 == 0)."""
    R, C = x2.shape
    itemsize = x2.dtype.itemsize
    # Dtype-aware sublane multiple: 8 rows f32, 16 bf16/f16, 32 int8/fp8.
    sub = _SUBLANE * max(1, 4 // max(1, itemsize))
    row_bytes = max(1, C * itemsize)
    target = cfg.block_bytes

    if sub * row_bytes <= target:
        # Full-width row blocks, 1-D grid: one contiguous DMA per grid step.
        tr = min(R, max(1, target // row_bytes))
        if tr < R:
            tr = max(sub, (tr // sub) * sub)
        elif cfg.num_tc > 1 and R >= cfg.num_tc * 2 * sub:
            # v7x only: whole array fits one block.  Split so each TensorCore
            # gets >= 2 grid steps (restores double-buffer pipelining per core).
            n_blocks = cfg.num_tc * 2
            per = -(-R // n_blocks)
            tr = min(R, max(sub, ((per + sub - 1) // sub) * sub))
        grid = (pl.cdiv(R, tr),)
        in_specs = [pl.BlockSpec((tr, C), lambda i: (i, 0))]
        out_specs = pl.BlockSpec((tr, C), lambda i: (i, 0))
        dims = ("parallel",)
    else:
        # Extremely wide rows: tile the lane axis too (rare path).
        tc = max(_LANE, (target // (sub * itemsize) // _LANE) * _LANE)
        tc = min(C, tc)
        tr = min(R, sub)
        grid = (pl.cdiv(R, tr), pl.cdiv(C, tc))
        in_specs = [pl.BlockSpec((tr, tc), lambda i, j: (i, j))]
        out_specs = pl.BlockSpec((tr, tc), lambda i, j: (i, j))
        dims = ("parallel", "parallel")

    cp_kwargs = dict(dimension_semantics=dims)
    if cfg.vmem_limit is not None:
        cp_kwargs["vmem_limit_bytes"] = cfg.vmem_limit

    return pl.pallas_call(
        _swish_kernel,
        out_shape=jax.ShapeDtypeStruct((R, C), x2.dtype),
        grid_spec=pltpu.PrefetchScalarGridSpec(
            num_scalar_prefetch=0,
            grid=grid,
            in_specs=in_specs,
            out_specs=out_specs,
        ),
        compiler_params=pltpu.CompilerParams(**cp_kwargs),
    )(x2)


def _pick_width(n):
    """Widest lane width (multiple of 128) that divides n, preferring >= 8 rows."""
    for w in (2048, 1024, 512, 256, 128):
        if n % w == 0 and n // w >= _SUBLANE:
            return w
    for w in (2048, 1024, 512, 256, 128):
        if n % w == 0:
            return w
    return 0


def swish(x):
    """Elementwise Swish via Pallas. Accepts any-rank input, preserves shape/dtype."""
    orig_shape = x.shape
    n = x.size
    if n == 0:
        return x  # empty input: nothing to compute

    cfg = _chip_config()

    if n % _LANE == 0:
        width = _pick_width(n)
        x2 = x.reshape(n // width, width)
        return _swish_2d(x2, cfg).reshape(orig_shape)

    # Awkward total size: pad the flattened vector up to the next multiple of
    # 1024 (8 x 128) so the kernel output stays lane-dense (no masked partial
    # stores), then slice the padding back off.  swish(0) == 0, and the padded
    # tail is discarded anyway.
    pad_to = 8 * _LANE
    n_pad = -(-n // pad_to) * pad_to
    flat = jnp.pad(x.reshape(-1), (0, n_pad - n))
    width = _pick_width(n_pad)
    y = _swish_2d(flat.reshape(n_pad // width, width), cfg)
    return y.reshape(-1)[:n].reshape(orig_shape)


if __name__ == "__main__":
    key = jax.random.PRNGKey(0)
    # Small NCHW-like activation consistent with typical usage: [2, 4, 16, 16].
    x = jax.random.normal(key, (2, 4, 16, 16), dtype=jnp.float32)

    y = swish(x)
    y = jax.block_until_ready(y)

    # Reference check in plain JAX.
    y_ref = x * jax.nn.sigmoid(x)
    assert y.shape == x.shape and y.dtype == x.dtype
    assert jnp.allclose(y, y_ref, atol=1e-6, rtol=1e-6)

    # Also exercise the awkward-size (padded) path with a non-128-multiple size.
    x_odd = jax.random.normal(jax.random.PRNGKey(1), (3, 5, 7), dtype=jnp.float32)
    y_odd = jax.block_until_ready(swish(x_odd))
    assert jnp.allclose(y_odd, x_odd * jax.nn.sigmoid(x_odd), atol=1e-6, rtol=1e-6)

    print("KERNEL_OK")
</pallas_src>

<mosaic_0001>
module attributes {stable_mosaic.version = 11 : i64} {
  func.func @_swish_kernel(%arg0: i32, %arg1: memref<8x256xf32, #tpu.memory_space<vmem>>, %arg2: memref<8x256xf32, #tpu.memory_space<vmem>>) attributes {dimension_semantics = [#tpu.dimension_semantics<parallel>], iteration_bounds = array<i64: 1>, scalar_prefetch = 0 : i64, scratch_operands = 0 : i64, tpu.core_type = #tpu.core_type<tc>, window_params = [{transform_indices = @transform_0, window_bounds = array<i64: 8, 256>}, {transform_indices = @transform_1, window_bounds = array<i64: 8, 256>}]} {
    %c0 = arith.constant 0 : index
    %c0_0 = arith.constant 0 : index
    %0 = vector.load %arg1[%c0, %c0_0] : memref<8x256xf32, #tpu.memory_space<vmem>>, vector<8x256xf32>
    %1 = arith.negf %0 : vector<8x256xf32>
    %2 = math.exp %1 : vector<8x256xf32>
    %cst = arith.constant 1.000000e+00 : f32
    %3 = vector.broadcast %cst : f32 to vector<8x256xf32>
    %4 = arith.addf %3, %2 : vector<8x256xf32>
    %5 = arith.divf %3, %4 : vector<8x256xf32>
    %6 = arith.mulf %0, %5 : vector<8x256xf32>
    %c0_1 = arith.constant 0 : index
    %c0_2 = arith.constant 0 : index
    %7 = vector.load %arg2[%c0_1, %c0_2] : memref<8x256xf32, #tpu.memory_space<vmem>>, vector<8x256xf32>
    tpu.vector_store %arg2[%c0_1, %c0_2], %6 {strides = array<i32>} : memref<8x256xf32, #tpu.memory_space<vmem>>, vector<8x256xf32>,
    return
  }
  func.func @transform_0(%arg0: i32) -> (i32, i32) {
    %c0_i32 = arith.constant 0 : i32
    %c0_i32_0 = arith.constant 0 : i32
    return %arg0, %c0_i32 : i32, i32
  }
  func.func @transform_1(%arg0: i32) -> (i32, i32) {
    %c0_i32 = arith.constant 0 : i32
    %c0_i32_0 = arith.constant 0 : i32
    return %arg0, %c0_i32 : i32, i32
  }
}

</mosaic_0001>

<llo_original>
// kernel: tpu_custom_call.1
$region0: #{tpu_custom_call.1}
  #allocation0 [shape = 'u32[]', space=smem, size = 0x4, offset = 0x4, fixed_abs, tag = 'smem constant byte address 0x4 - core index']
  #allocation1 [shape = 'u32[144,128]{1,0:T(1,128)}', space=vmem, size = 0x12000, scoped, tag = 'internal scratch']
  %s0 = inlined_call_operand.hbm [shape: f32[8,256], index: 0, kind: input, shape index: {}]
  %s1 = inlined_call_operand.hbm [shape: f32[8,256], index: 1, kind: output, shape index: {}]
  %s2 = sld [smem:[#allocation0]]
  $region18: #{tpu_custom_call.1} parent=0
    _
  %s4 = ssub.s32 1, %s2
  %s5 = scalar_select 0, %s4, %s2
  $region1: #{tpu_custom_call.1} parent=0
    #allocation2 [shape = 'u8[8192]{0}', space=vmem, size = 0x2000, scoped, tag = 'input window, operand 0, single buffered']
    #allocation3 [shape = 's32[1]{0}', space=sflag, size = 0x4, scoped, tag = 'scoped memory for tpu_custom_call.1']
    #allocation4 [shape = 's32[1]{0}', space=sflag, size = 0x4, scoped, tag = 'scoped memory for tpu_custom_call.1']
    #allocation5 [shape = 'u8[8192]{0}', space=vmem, size = 0x2000, scoped, tag = 'output window, operand 0, single buffered']
    %6 = vsyncpa [#allocation3], 0
    %7 = vsyncpa [#allocation4], 0
    // Predicated region
    $region2: #{tpu_custom_call.1} parent=1 // pred_check
      _
    $region3: #{tpu_custom_call.1} parent=1 // pred_check_branch
      %9 = sbr.rel (0) target = $region5
    $region4: #{tpu_custom_call.1} parent=1 // pred_region
      %s11 = ssub.s32 256, 256
      %12 = vsyncadd [#allocation3], %s11
      %s14 = sshll.u32 [#allocation2], 4
      %s15 = int_to_ptr.vmem [resolvable:$true] %s14
      %17 = dma.hbm_to_vmem [thread:$0]  %s0, 256, %s15, [#allocation3]
    $region5: #{tpu_custom_call.1} parent=1 // pred_fallthru
      _
    // Predicated region
    $region6: #{tpu_custom_call.1} parent=1 // pred_check
      _
    $region7: #{tpu_custom_call.1} parent=1 // pred_check_branch
      %19 = sbr.rel (0) target = $region9
    $region8: #{tpu_custom_call.1} parent=1 // pred_region
      %20 = dma.done [#allocation3], 256
    $region9: #{tpu_custom_call.1} parent=1 // pred_fallthru
      _
    %v21 = vld [vmem:[#allocation2] sm:$0xff]
    %v22 = vld [vmem:[#allocation2 + $0x8] sm:$0xff]
    %v23 = vxor.u32 %v21, 2147483648
    %v24 = vxor.u32 %v22, 2147483648
    %v25 = vmul.f32 %v23, 1.442695
    %v26 = vpow.pop %v25
    %v27 = vmul.f32 %v24, 1.442695
    %v28 = vpow.pop %v27
    %v29 = vadd.f32 %v26, 1.0
    %v30 = vadd.f32 %v28, 1.0
    %v31 = vrcp.pop %v29
    %v32 = vmul.f32 1.0, %v31
    %v33 = vrcp.pop %v30
    %v34 = vmul.f32 1.0, %v33
    %v35 = vmul.f32 %v21, %v32
    %v36 = vmul.f32 %v22, %v34
    %37 = vst [vmem:[#allocation5] sm:$0xff] %v35
    %38 = vst [vmem:[#allocation5 + $0x8] sm:$0xff] %v36
    // Predicated region
    $region10: #{tpu_custom_call.1} parent=1 // pred_check
      _
    $region11: #{tpu_custom_call.1} parent=1 // pred_check_branch
      %40 = sbr.rel (0) target = $region13
    $region12: #{tpu_custom_call.1} parent=1 // pred_region
      %s42 = ssub.s32 256, 256
      %43 = vsyncadd [#allocation4], %s42
      %s45 = sshll.u32 [#allocation5], 4
      %s46 = int_to_ptr.vmem [resolvable:$true] %s45
      %48 = dma.vmem_to_hbm [thread:$0]  %s46, 256, %s1, [#allocation4]
    $region13: #{tpu_custom_call.1} parent=1 // pred_fallthru
      _
    // Predicated region
    $region14: #{tpu_custom_call.1} parent=1 // pred_check
      _
    $region15: #{tpu_custom_call.1} parent=1 // pred_check_branch
      %50 = sbr.rel (0) target = $region17
    $region16: #{tpu_custom_call.1} parent=1 // pred_region
      %51 = dma.done [#allocation4], 256
    $region17: #{tpu_custom_call.1} parent=1 // pred_fallthru
      _
    %52 = vsyncpa [#allocation3], 1
    %53 = vsyncpa [#allocation4], 1

</llo_original>
